<compile_context>
chip_gen: v7x
topology: tpu7x:2x2x1
jax: 0.10.0
libtpu: 0.0.40
codegen_flags: <defaults>
</compile_context>

<pallas_src>
import numpy as np
import jax
import jax.numpy as jnp
from jax.experimental import pallas as pl
from jax.experimental.pallas import tpu as pltpu


def _silu(y):
    return y * (1.0 / (1.0 + jnp.exp(-y)))


def _round_up(a, b):
    return ((a + b - 1) // b) * b


def _cdiv(a, b):
    return -(-a // b)


# ------------------------ pooling / upsample matrices ------------------------
def _pool_matrix_1d(k, size):
    """Adaptive average pooling weights along one axis: (k, size)."""
    P = np.zeros((k, size), np.float64)
    for i in range(k):
        s = (i * size) // k
        e = -(-((i + 1) * size) // k)          # ceil
        P[i, s:e] = 1.0 / (e - s)
    return P


def _upsample_matrix_1d(out_size, k):
    """Bilinear (align_corners=True) upsample weights along one axis: (out_size, k)."""
    U = np.zeros((out_size, k), np.float64)
    if k == 1 or out_size == 1:
        U[:, 0] = 1.0
        return U
    for y in range(out_size):
        sy = y * (k - 1) / (out_size - 1)
        y0 = min(int(np.floor(sy)), k - 1)
        y1 = min(y0 + 1, k - 1)
        w1 = sy - y0
        U[y, y0] += 1.0 - w1
        U[y, y1] += w1
    return U


# ---------------- kernel 1: adaptive pooling as tiled matmul (accumulate) ----------------
def _make_pool_kernel(tm, HW, needs_mask):
    def kernel(p_ref, x_ref, pp_ref, acc_ref):
        s = pl.program_id(1)
        j = pl.program_id(2)
        t_half = pl.num_programs(2)

        @pl.when(j == 0)
        def _():
            acc_ref[...] = jnp.zeros_like(acc_ref)

        xv = x_ref[0].astype(jnp.float32)
        if needs_mask:
            # Mask rows beyond HW: covers the partial last tile and the fully
            # out-of-range clamped-duplicate tile created by the NS split.
            row = (s * t_half + j) * tm + jax.lax.broadcasted_iota(
                jnp.int32, (tm, 1), 0)
            xv = jnp.where(row < HW, xv, 0.0)

        # pooled += P_tile @ x_tile : (Ktot, tm) @ (tm, C)
        acc_ref[...] += jnp.dot(p_ref[...].astype(jnp.float32), xv,
                                preferred_element_type=jnp.float32)

        @pl.when(j == pl.num_programs(2) - 1)
        def _():
            pp_ref[0, 0] = acc_ref[...]

    return kernel


# -------- kernel 1b: combine partial sums + single 1x1 conv + BN + SiLU + block-diag mask --------
def _make_finalize_kernel(ns):
    def kernel(pp_ref, w_ref, s_ref, b_ref, m_ref, feats_ref):
        pooled = pp_ref[0, 0]                        # (Ktot, C)
        for s in range(1, ns):
            pooled = pooled + pp_ref[0, s]
        # one MXU push for all branches
        y = jnp.dot(pooled, w_ref[...], preferred_element_type=jnp.float32)
        y = y * s_ref[...] + b_ref[...]              # folded BN
        y = _silu(y)
        # block-diagonal mask applied AFTER SiLU (SiLU(bias) != 0 off-block)
        feats_ref[0] = (y * m_ref[...]).astype(feats_ref.dtype)

    return kernel


# -------- kernel 2: fused bilinear upsample (all branches) + channel concat --------
def _up_concat_kernel(x_ref, u_ref, f_ref, o_ref):
    # one deep matmul: (tm, Ktot) @ (Ktot, 4*Co) -> all four upsampled branches
    up = jnp.dot(u_ref[...].astype(jnp.float32), f_ref[0],
                 preferred_element_type=jnp.float32)
    # cast `up` first, then concat with x already in the output dtype
    o_ref[0] = jnp.concatenate([x_ref[0], up.astype(o_ref.dtype)], axis=-1)
    # NOTE: keep C and 4*Co multiples of 128 in production so the concat is a
    # vreg-boundary merge and the store stays fully lane-dense.


# ------------------------------ forward wrapper ------------------------------
def pyramid_pooling_forward(x, w_all, scale_all, bias_all, ks=(1, 2, 3, 6),
                            tm_max=1024, vmem_budget=32 * 1024 * 1024):
    """x: (N, H, W, C) NHWC.  Returns (N, H, W, C + 4*(C//4))."""
    N, H, W, C = x.shape
    Co = w_all.shape[-1]
    nb = len(ks)
    nbCo = nb * Co
    k2s = [k * k for k in ks]
    offs = [int(v) for v in np.cumsum([0] + k2s[:-1])]
    Ktot = int(sum(k2s))
    HW = H * W
    x_bytes = int(jnp.dtype(x.dtype).itemsize)

    # ---- tile policy: balanced cdiv tiling, multiple of 128, VMEM-budgeted ----
    # kernel-2 working set per spatial row (double-buffered x/U/out tiles)
    row_bytes = 2 * (C * x_bytes + Ktot * 2 + (C + nbCo) * x_bytes)
    cap = max(128, (vmem_budget // max(row_bytes, 1)) // 128 * 128)
    tm_max = max(128, min(_round_up(tm_max, 128), cap))
    T = _cdiv(HW, tm_max)
    tm = min(_round_up(_cdiv(HW, T), 128), tm_max)
    T = _cdiv(HW, tm)
    HWp = T * tm

    # Split the HW reduction into 2 parallel chains when there is no batch
    # parallelism (single-image calls on v7x: both TensorCores stream x).
    NS = 2 if (N == 1 and T >= 2) else 1
    T_half = _cdiv(T, NS)
    needs_mask = (HWp != HW) or (NS * T_half != T)

    # ---- precomputed linear maps (host constants, bf16, zero-padded) ----
    P_np = np.concatenate(
        [np.kron(_pool_matrix_1d(k, H), _pool_matrix_1d(k, W)) for k in ks],
        axis=0)                                                  # (Ktot, HW)
    U_np = np.concatenate(
        [np.kron(_upsample_matrix_1d(H, k), _upsample_matrix_1d(W, k)) for k in ks],
        axis=1)                                                  # (HW, Ktot)
    P_all = jnp.asarray(np.pad(P_np, ((0, 0), (0, HWp - HW))), jnp.bfloat16)
    U_all = jnp.asarray(np.pad(U_np, ((0, HWp - HW), (0, 0))), jnp.bfloat16)

    # block-diagonal 0/1 mask for the fused 4-branch conv
    mask_np = np.zeros((Ktot, nbCo), np.float32)
    for b in range(nb):
        mask_np[offs[b]:offs[b] + k2s[b], b * Co:(b + 1) * Co] = 1.0
    bd_mask = jnp.asarray(mask_np)

    # concatenated conv / BN parameters: (C, 4*Co), (1, 4*Co)
    w_cat = jnp.transpose(w_all, (1, 0, 2)).reshape(C, nbCo)
    s_cat = scale_all.reshape(1, nbCo)
    b_cat = bias_all.reshape(1, nbCo)

    x_flat = x.reshape(N, HW, C)                     # free metadata reshape

    cparams = pltpu.CompilerParams(
        dimension_semantics=("parallel", "parallel", "arbitrary"),
        vmem_limit_bytes=40 * 1024 * 1024)

    # ---- kernel 1: pooled partial sums (N, NS, Ktot, C) ----
    def _g(s, j):  # clamped global tile index (duplicates are fully row-masked)
        return jnp.minimum(s * T_half + j, T - 1)

    pooled_parts = pl.pallas_call(
        _make_pool_kernel(tm, HW, needs_mask),
        out_shape=jax.ShapeDtypeStruct((N, NS, Ktot, C), jnp.float32),
        grid=(N, NS, T_half),
        in_specs=[
            pl.BlockSpec((Ktot, tm), lambda n, s, j: (0, _g(s, j))),
            pl.BlockSpec((1, tm, C), lambda n, s, j: (n, _g(s, j), 0)),
        ],
        out_specs=pl.BlockSpec((1, 1, Ktot, C), lambda n, s, j: (n, s, 0, 0)),
        scratch_shapes=[pltpu.VMEM((Ktot, C), jnp.float32)],
        compiler_params=cparams,
        cost_estimate=pl.CostEstimate(
            flops=2 * N * HW * Ktot * C,
            transcendentals=0,
            bytes_accessed=N * HW * C * x_bytes + N * HWp * Ktot * 2
                           + N * NS * Ktot * C * 4),
    )(P_all, x_flat)

    # ---- kernel 1b: combine halves + single conv + BN + SiLU + block-diag mask ----
    feats = pl.pallas_call(
        _make_finalize_kernel(NS),
        out_shape=jax.ShapeDtypeStruct((N, Ktot, nbCo), jnp.float32),
        grid=(N,),
        in_specs=[
            pl.BlockSpec((1, NS, Ktot, C), lambda n: (n, 0, 0, 0)),
            pl.BlockSpec((C, nbCo), lambda n: (0, 0)),
            pl.BlockSpec((1, nbCo), lambda n: (0, 0)),
            pl.BlockSpec((1, nbCo), lambda n: (0, 0)),
            pl.BlockSpec((Ktot, nbCo), lambda n: (0, 0)),
        ],
        out_specs=pl.BlockSpec((1, Ktot, nbCo), lambda n: (n, 0, 0)),
        compiler_params=pltpu.CompilerParams(dimension_semantics=("parallel",)),
        cost_estimate=pl.CostEstimate(
            flops=2 * N * Ktot * C * nbCo,
            transcendentals=N * Ktot * nbCo,
            bytes_accessed=N * NS * Ktot * C * 4 + C * nbCo * 4
                           + N * Ktot * nbCo * 4),
    )(pooled_parts, w_cat, s_cat, b_cat, bd_mask)

    # ---- kernel 2: fused upsample of all branches + concat with x ----
    # tile axis OUTER so U_all stays resident across images (revisit skip);
    # OOB rows of the last tile are dropped on store (no wrapper pad/slice).
    out = pl.pallas_call(
        _up_concat_kernel,
        out_shape=jax.ShapeDtypeStruct((N, HW, C + nbCo), x.dtype),
        grid=(T, N),
        in_specs=[
            pl.BlockSpec((1, tm, C), lambda i, n: (n, i, 0)),
            pl.BlockSpec((tm, Ktot), lambda i, n: (i, 0)),
            pl.BlockSpec((1, Ktot, nbCo), lambda i, n: (n, 0, 0)),
        ],
        out_specs=pl.BlockSpec((1, tm, C + nbCo), lambda i, n: (n, i, 0)),
        compiler_params=pltpu.CompilerParams(
            dimension_semantics=("parallel", "parallel"),
            vmem_limit_bytes=40 * 1024 * 1024),
        cost_estimate=pl.CostEstimate(
            flops=2 * N * HW * Ktot * nbCo,
            transcendentals=0,
            bytes_accessed=N * HW * C * x_bytes + HWp * Ktot * 2
                           + N * Ktot * nbCo * 4
                           + N * HW * (C + nbCo) * x_bytes),
    )(x_flat, U_all, feats)

    return out.reshape(N, H, W, C + nbCo)


# --------------------------- parameter setup (synthetic) ---------------------------
def _fold_bn(gamma, beta, mean, var, eps=1e-5):
    scale = gamma / jnp.sqrt(var + eps)
    bias = beta - mean * scale
    return scale, bias


def init_params(key, in_channels, ks=(1, 2, 3, 6)):
    Co = in_channels // 4
    nb = len(ks)
    ws, ss, bs = [], [], []
    for kk in jax.random.split(key, nb):
        k1, k2, k3, k4, k5 = jax.random.split(kk, 5)
        w = jax.random.normal(k1, (in_channels, Co), jnp.float32) / np.sqrt(in_channels)
        gamma = jax.random.uniform(k2, (Co,), jnp.float32, 0.5, 1.5)
        beta = 0.1 * jax.random.normal(k3, (Co,), jnp.float32)
        mean = 0.1 * jax.random.normal(k4, (Co,), jnp.float32)
        var = jax.random.uniform(k5, (Co,), jnp.float32, 0.5, 1.5)
        scale, bias = _fold_bn(gamma, beta, mean, var)
        ws.append(w)
        ss.append(scale.reshape(1, Co))
        bs.append(bias.reshape(1, Co))
    return jnp.stack(ws, 0), jnp.stack(ss, 0), jnp.stack(bs, 0)


# ------------------------------ pure-JAX reference ------------------------------
def _adaptive_avg_pool_ref(x, k):
    N, H, W, C = x.shape
    rows = []
    for i in range(k):
        hs, he = (i * H) // k, -(-((i + 1) * H) // k)
        cols = []
        for j in range(k):
            ws, we = (j * W) // k, -(-((j + 1) * W) // k)
            cols.append(jnp.mean(x[:, hs:he, ws:we, :], axis=(1, 2)))
        rows.append(jnp.stack(cols, axis=1))
    return jnp.stack(rows, axis=1)                   # (N, k, k, C)


def _bilinear_up_ref(f, H, W):
    # align_corners=True, gather-based (independent of the matrix construction)
    N, kh, kw, C = f.shape

    def axis(out, k):
        if k == 1 or out == 1:
            i0 = np.zeros((out,), np.int64)
            return i0, i0, np.ones((out,)), np.zeros((out,))
        src = np.arange(out) * (k - 1) / (out - 1)
        i0 = np.minimum(np.floor(src).astype(np.int64), k - 1)
        i1 = np.minimum(i0 + 1, k - 1)
        w1 = src - i0
        return i0, i1, 1.0 - w1, w1

    y0, y1, wy0, wy1 = axis(H, kh)
    x0, x1, wx0, wx1 = axis(W, kw)
    fy = (f[:, y0, :, :] * wy0[None, :, None, None]
          + f[:, y1, :, :] * wy1[None, :, None, None])
    return (fy[:, :, x0, :] * wx0[None, None, :, None]
            + fy[:, :, x1, :] * wx1[None, None, :, None])


def pyramid_pooling_ref(x, w_all, scale_all, bias_all, ks=(1, 2, 3, 6)):
    N, H, W, C = x.shape
    feats = [x]
    for i, k in enumerate(ks):
        p = _adaptive_avg_pool_ref(x, k)
        y = jnp.einsum("nhwc,cd->nhwd", p, w_all[i])
        y = y * scale_all[i, 0] + bias_all[i, 0]
        y = _silu(y)
        feats.append(_bilinear_up_ref(y, H, W))
    return jnp.concatenate(feats, axis=-1)


if __name__ == "__main__":
    key = jax.random.PRNGKey(0)
    kx, kp, kx2 = jax.random.split(key, 3)

    # NHWC (2, 16, 16, 64)  <->  PyTorch NCHW (2, 64, 16, 16).
    # in_channels=64 makes the fused output 128 channels wide (lane-dense stores).
    N, H, W, C = 2, 16, 16, 64
    x = jax.random.normal(kx, (N, H, W, C), jnp.float32)
    w_all, s_all, b_all = init_params(kp, C)

    out = jax.block_until_ready(pyramid_pooling_forward(x, w_all, s_all, b_all))
    ref = pyramid_pooling_ref(x, w_all, s_all, b_all)
    assert out.shape == (N, H, W, 2 * C), out.shape
    err = float(jnp.max(jnp.abs(out - ref)))
    # bf16 pool/upsample constants -> relaxed tolerance (review feedback)
    assert err < 5e-2, err

    # Second check: non-divisible spatial tiling (masked partial tiles / dropped
    # OOB output rows) and the single-image NS=2 reduction split.
    H2, W2 = 24, 24
    x2 = jax.random.normal(kx2, (1, H2, W2, C), jnp.float32)
    out2 = jax.block_until_ready(
        pyramid_pooling_forward(x2, w_all, s_all, b_all, tm_max=128))
    ref2 = pyramid_pooling_ref(x2, w_all, s_all, b_all)
    assert out2.shape == (1, H2, W2, 2 * C), out2.shape
    err2 = float(jnp.max(jnp.abs(out2 - ref2)))
    assert err2 < 5e-2, err2

    print("KERNEL_OK")
</pallas_src>

<mosaic_0001>
module attributes {stable_mosaic.version = 11 : i64} {
  func.func @kernel(%arg0: i32, %arg1: i32, %arg2: i32, %arg3: memref<50x256xbf16, #tpu.memory_space<vmem>>, %arg4: memref<1x256x64xf32, #tpu.memory_space<vmem>>, %arg5: memref<1x1x50x64xf32, #tpu.memory_space<vmem>>, %arg6: memref<50x64xf32, #tpu.memory_space<vmem>>) attributes {dimension_semantics = [#tpu.dimension_semantics<parallel>, #tpu.dimension_semantics<parallel>, #tpu.dimension_semantics<arbitrary>], iteration_bounds = array<i64: 2, 1, 1>, scalar_prefetch = 0 : i64, scratch_operands = 1 : i64, tpu.core_type = #tpu.core_type<tc>, window_params = [{transform_indices = @transform_0, window_bounds = array<i64: 50, 256>}, {transform_indices = @transform_1, window_bounds = array<i64: 1, 256, 64>}, {transform_indices = @transform_2, window_bounds = array<i64: 1, 1, 50, 64>}]} {
    %c0_i32 = arith.constant 0 : i32
    %0 = arith.cmpi eq, %arg2, %c0_i32 : i32
    %1 = arith.extui %0 : i1 to i32
    %c0_i32_0 = arith.constant 0 : i32
    %2 = arith.cmpi ne, %1, %c0_i32_0 : i32
    scf.if %2 {
      %cst_11 = arith.constant 0.000000e+00 : f32
      %14 = vector.broadcast %cst_11 : f32 to vector<50x64xf32>
      %c0_12 = arith.constant 0 : index
      %c0_13 = arith.constant 0 : index
      %15 = vector.load %arg6[%c0_12, %c0_13] : memref<50x64xf32, #tpu.memory_space<vmem>>, vector<50x64xf32>
      tpu.vector_store %arg6[%c0_12, %c0_13], %14 {strides = array<i32>} : memref<50x64xf32, #tpu.memory_space<vmem>>, vector<50x64xf32>,
    } else {
    }
    %c0 = arith.constant 0 : index
    %c0_1 = arith.constant 0 : index
    %c0_2 = arith.constant 0 : index
    %3 = vector.load %arg4[%c0, %c0_1, %c0_2] : memref<1x256x64xf32, #tpu.memory_space<vmem>>, vector<1x256x64xf32>
    %4 = vector.shape_cast %3 : vector<1x256x64xf32> to vector<256x64xf32>
    %c0_3 = arith.constant 0 : index
    %c0_4 = arith.constant 0 : index
    %5 = vector.load %arg6[%c0_3, %c0_4] : memref<50x64xf32, #tpu.memory_space<vmem>>, vector<50x64xf32>
    %c0_5 = arith.constant 0 : index
    %c0_6 = arith.constant 0 : index
    %6 = vector.load %arg3[%c0_5, %c0_6] : memref<50x256xbf16, #tpu.memory_space<vmem>>, vector<50x256xbf16>
    %7 = arith.extf %6 : vector<50x256xbf16> to vector<50x256xf32>
    %cst = arith.constant dense<0.000000e+00> : vector<50x64xf32>
    %8 = tpu.matmul %7, %4, %cst {dimension_numbers = #tpu.dot_dimension_numbers<[1], [0], [0], [1], [0, 0, 1, 1], [], []>} : vector<50x256xf32>, vector<256x64xf32>, vector<50x64xf32> -> vector<50x64xf32>
    %9 = arith.addf %5, %8 : vector<50x64xf32>
    %c0_7 = arith.constant 0 : index
    %c0_8 = arith.constant 0 : index
    %10 = vector.load %arg6[%c0_7, %c0_8] : memref<50x64xf32, #tpu.memory_space<vmem>>, vector<50x64xf32>
    tpu.vector_store %arg6[%c0_7, %c0_8], %9 {strides = array<i32>} : memref<50x64xf32, #tpu.memory_space<vmem>>, vector<50x64xf32>,
    %c0_i32_9 = arith.constant 0 : i32
    %11 = arith.cmpi eq, %arg2, %c0_i32_9 : i32
    %12 = arith.extui %11 : i1 to i32
    %c0_i32_10 = arith.constant 0 : i32
    %13 = arith.cmpi ne, %12, %c0_i32_10 : i32
    scf.if %13 {
      %c0_11 = arith.constant 0 : index
      %c0_12 = arith.constant 0 : index
      %14 = vector.load %arg6[%c0_11, %c0_12] : memref<50x64xf32, #tpu.memory_space<vmem>>, vector<50x64xf32>
      %c0_13 = arith.constant 0 : index
      %c0_14 = arith.constant 0 : index
      %c0_15 = arith.constant 0 : index
      %c0_16 = arith.constant 0 : index
      %15 = vector.load %arg5[%c0_13, %c0_14, %c0_15, %c0_16] : memref<1x1x50x64xf32, #tpu.memory_space<vmem>>, vector<1x1x50x64xf32>
      %16 = vector.shape_cast %15 : vector<1x1x50x64xf32> to vector<50x64xf32>
      %17 = vector.shape_cast %14 : vector<50x64xf32> to vector<1x1x50x64xf32>
      tpu.vector_store %arg5[%c0_13, %c0_14, %c0_15, %c0_16], %17 {strides = array<i32>} : memref<1x1x50x64xf32, #tpu.memory_space<vmem>>, vector<1x1x50x64xf32>,
    } else {
    }
    return
  }
  func.func @transform_0(%arg0: i32, %arg1: i32, %arg2: i32) -> (i32, i32) {
    %c1_i32 = arith.constant 1 : i32
    %0 = arith.muli %arg1, %c1_i32 : i32
    %1 = arith.addi %0, %arg2 : i32
    %c0_i32 = arith.constant 0 : i32
    %2 = arith.minsi %1, %c0_i32 : i32
    %c0_i32_0 = arith.constant 0 : i32
    %c0_i32_1 = arith.constant 0 : i32
    return %c0_i32_0, %2 : i32, i32
  }
  func.func @transform_1(%arg0: i32, %arg1: i32, %arg2: i32) -> (i32, i32, i32) {
    %c1_i32 = arith.constant 1 : i32
    %0 = arith.muli %arg1, %c1_i32 : i32
    %1 = arith.addi %0, %arg2 : i32
    %c0_i32 = arith.constant 0 : i32
    %2 = arith.minsi %1, %c0_i32 : i32
    %c0_i32_0 = arith.constant 0 : i32
    %c0_i32_1 = arith.constant 0 : i32
    return %arg0, %2, %c0_i32_0 : i32, i32, i32
  }
  func.func @transform_2(%arg0: i32, %arg1: i32, %arg2: i32) -> (i32, i32, i32, i32) {
    %c0_i32 = arith.constant 0 : i32
    %c0_i32_0 = arith.constant 0 : i32
    %c0_i32_1 = arith.constant 0 : i32
    return %arg0, %arg1, %c0_i32, %c0_i32_0 : i32, i32, i32, i32
  }
}

</mosaic_0001>

<llo_original>
// kernel: tpu_custom_call.1
$region0: #{tpu_custom_call.1}
  #allocation0 [shape = 'u32[]', space=smem, size = 0x4, offset = 0x4, fixed_abs, tag = 'smem constant byte address 0x4 - core index']
  #allocation1 [shape = 'u32[144,128]{1,0:T(1,128)}', space=vmem, size = 0x12000, scoped, tag = 'internal scratch']
  #allocation2 [shape = 'f32[50,64]{1,0:T(8,128)}', space=vmem, size = 0x7000, scoped, tag = 'scratch operand']
  %s0 = inlined_call_operand.vmem [shape: bf16[50,256], index: 0, kind: input, shape index: {}]
  %s1 = inlined_call_operand.vmem [shape: f32[2,256,64], index: 1, kind: input, shape index: {}]
  %s2 = inlined_call_operand.vmem [shape: f32[2,1,50,64], index: 2, kind: output, shape index: {}]
  %s3 = sld [smem:[#allocation0]]
  $region49: #{tpu_custom_call.1} parent=0
    _
  %s5 = ssub.s32 1, %s3
  %s6 = scalar_select 0, %s5, %s3
  loop: start=0, step=1, limit=4
  $region2: #{tpu_custom_call.1} parent=0 // loop_pre_header
    _
  $region3: #{tpu_custom_call.1} parent=0 // loop_header
    %s8 = sphi 0, %s12
    %p9 = scmp.ge.s32.totalorder %s8, 4
    %s15 = sphi 0, %s34
    %s16 = sphi 0, %s30
    %s17 = sphi 0, %s26
    %s18 = sphi 0, %s15
    %s19 = sphi 0, %s16
    %s20 = sphi 0, %s17
    %s21 = sphi 0, %s18
    %s22 = sphi 0, %s19
    %s23 = sphi 0, %s20
    %s43 = sphi 0, %s45
    %s46 = sphi 0, %s43
    %s47 = sphi 0, %s46
    %s63 = sphi 0, %s47
    %s77 = sphi 0, %s79
    %s80 = sphi 0, %s77
    %s81 = sphi 0, %s80
    %s97 = sphi 0, %s81
    %s105 = sphi 0, %s107
    %s108 = sphi 0, %s105
    %s109 = sphi 0, %s108
    %s125 = sphi 0, %s109
  $region4: #{tpu_custom_call.1} parent=0 // loop_header_branch
    %11 = sbr.rel (%p9) target = $region8
  $region5: #{tpu_custom_call.1} parent=0 // loop_body
    %s13 = ssub.s32 %s8, 1
    %s14 = ssub.s32 %s8, 2
    %s24 = sadd.s32 1, %s17
    %p25 = scmp.ge.s32.totalorder %s24, 1
    %s26 = scalar_select %p25, 0, %s24
    %s27 = sadd.s32 1, %s16
    %s28 = scalar_select %p25, %s27, %s16
    %p29 = scmp.ge.s32.totalorder %s28, 1
    %s30 = scalar_select %p29, 0, %s28
    %s31 = sadd.s32 1, %s15
    %s32 = scalar_select %p29, %s31, %s15
    %p33 = scmp.ge.s32.totalorder %s32, 2
    %s34 = scalar_select %p33, 0, %s32
    %s35 = sadd.s32 %s16, %s17
    %p36 = scmp.lt.s32.totalorder %s35, 0
    %s37 = scalar_select %p36, %s35, 0
    %s38 = sadd.s32 %s30, %s26
    %p39 = scmp.lt.s32.totalorder %s38, 0
    %s40 = scalar_select %p39, %s38, 0
    %s41 = ssub.s32 %s37, %s40
    %p42 = scmp.eq.s32.totalorder %s41, 0
    %s44 = sadd.s32 %s43, 1
    %s45 = scalar_select %p42, %s43, %s44
    %p48 = pneg %p42
    %p49 = scmp.eq.s32.totalorder %s8, 1
    %p50 = por %p48, %p49
    %p51 = scmp.ne.s32.totalorder %s43, %s46
    %p52 = scmp.eq.s32.totalorder %s8, 0
    %p53 = por %p51, %p52
    %p54 = scmp.ne.s32.totalorder %s43, %s46
    %p55 = scmp.eq.s32.totalorder %s13, 1
    %p56 = por %p54, %p55
    %p57 = scmp.ne.s32.totalorder %s46, %s47
    %p58 = scmp.eq.s32.totalorder %s13, 0
    %p59 = por %p57, %p58
    %p60 = scmp.ne.s32.totalorder %s46, %s47
    %p61 = scmp.eq.s32.totalorder %s14, 1
    %p62 = por %p60, %p61
    %p64 = scmp.ne.s32.totalorder %s47, %s63
    %p65 = scmp.eq.s32.totalorder %s14, 0
    %p66 = por %p64, %p65
    %s67 = sadd.s32 %s16, %s17
    %p68 = scmp.lt.s32.totalorder %s67, 0
    %s69 = scalar_select %p68, %s67, 0
    %s70 = sadd.s32 %s30, %s26
    %p71 = scmp.lt.s32.totalorder %s70, 0
    %s72 = scalar_select %p71, %s70, 0
    %s73 = ssub.s32 %s15, %s34
    %s74 = ssub.s32 %s69, %s72
    %s75 = sor.u32 %s73, %s74
    %p76 = scmp.eq.s32.totalorder %s75, 0
    %s78 = sadd.s32 %s77, 1
    %s79 = scalar_select %p76, %s77, %s78
    %p82 = pneg %p76
    %p83 = scmp.eq.s32.totalorder %s8, 1
    %p84 = por %p82, %p83
    %p85 = scmp.ne.s32.totalorder %s77, %s80
    %p86 = scmp.eq.s32.totalorder %s8, 0
    %p87 = por %p85, %p86
    %p88 = scmp.ne.s32.totalorder %s77, %s80
    %p89 = scmp.eq.s32.totalorder %s13, 1
    %p90 = por %p88, %p89
    %p91 = scmp.ne.s32.totalorder %s80, %s81
    %p92 = scmp.eq.s32.totalorder %s13, 0
    %p93 = por %p91, %p92
    %p94 = scmp.ne.s32.totalorder %s80, %s81
    %p95 = scmp.eq.s32.totalorder %s14, 1
    %p96 = por %p94, %p95
    %p98 = scmp.ne.s32.totalorder %s81, %s97
    %p99 = scmp.eq.s32.totalorder %s14, 0
    %p100 = por %p98, %p99
    %s101 = ssub.s32 %s15, %s34
    %s102 = ssub.s32 %s16, %s30
    %s103 = sor.u32 %s101, %s102
    %p104 = scmp.eq.s32.totalorder %s103, 0
    %s106 = sadd.s32 %s105, 1
    %s107 = scalar_select %p104, %s105, %s106
    %p110 = pneg %p104
    %p111 = scmp.eq.s32.totalorder %s8, 1
    %p112 = por %p110, %p111
    %p113 = scmp.ne.s32.totalorder %s105, %s108
    %p114 = scmp.eq.s32.totalorder %s8, 0
    %p115 = por %p113, %p114
    %p116 = scmp.ne.s32.totalorder %s105, %s108
    %p117 = scmp.eq.s32.totalorder %s13, 1
    %p118 = por %p116, %p117
    %p119 = scmp.ne.s32.totalorder %s108, %s109
    %p120 = scmp.eq.s32.totalorder %s13, 0
    %p121 = por %p119, %p120
    %p122 = scmp.ne.s32.totalorder %s108, %s109
    %p123 = scmp.eq.s32.totalorder %s14, 1
    %p124 = por %p122, %p123
    %p126 = scmp.ne.s32.totalorder %s109, %s125
    %p127 = scmp.eq.s32.totalorder %s14, 0
    %p128 = por %p126, %p127
    %p129 = scmp.le.s32.totalorder 1, %s8
    %p130 = scmp.lt.s32.totalorder %s8, 3
    %p131 = pnand %p129, %p130
    %p132 = pneg %p131
    // Predicated region
    $region9: #{tpu_custom_call.1} parent=5 // pred_check
      _
    $region10: #{tpu_custom_call.1} parent=5 // pred_check_branch
      %134 = sbr.rel (%p131) target = $region12
    $region11: #{tpu_custom_call.1} parent=5 // pred_region
      %s135 = ssub.s32 %s8, 1
      // Predicated region
      $region13: #{tpu_custom_call.1} parent=11 // pred_check
        %p136 = pneg %p59
      $region14: #{tpu_custom_call.1} parent=11 // pred_check_branch
        %138 = sbr.rel (%p136) target = $region16
      $region15: #{tpu_custom_call.1} parent=11 // pred_region
        %s139 = sadd.s32 %s19, %s20
        %p140 = scmp.lt.s32.totalorder %s139, 0
        %s141 = scalar_select %p140, %s139, 0
        %s142 = smul.u32 2, %s141
        %p143 = scmp.lt.s32.totalorder %s142, 1
        %s144 = scalar_select %p143, %s142, 1
        %s145 = smul.addr %s144, 4
        %s146 = scalar_lea.vmem %s0, %s145
        %s147 = sadd.s32 %s19, %s20
        %p148 = scmp.lt.s32.totalorder %s147, 0
        %s149 = scalar_select %p148, %s147, 0
        %s150 = smul.u32 2, %s149
      $region16: #{tpu_custom_call.1} parent=11 // pred_fallthru
        _
    $region12: #{tpu_custom_call.1} parent=5 // pred_fallthru
      _
    %p151 = scmp.lt.s32.totalorder %s8, 2
    // Predicated region
    $region17: #{tpu_custom_call.1} parent=5 // pred_check
      %p152 = pneg %p151
    $region18: #{tpu_custom_call.1} parent=5 // pred_check_branch
      %154 = sbr.rel (%p152) target = $region20
    $region19: #{tpu_custom_call.1} parent=5 // pred_region
      // Predicated region
      $region21: #{tpu_custom_call.1} parent=19 // pred_check
        %p155 = pneg %p87
      $region22: #{tpu_custom_call.1} parent=19 // pred_check_branch
        %157 = sbr.rel (%p155) target = $region24
      $region23: #{tpu_custom_call.1} parent=19 // pred_region
        %s158 = sadd.s32 %s16, %s17
        %p159 = scmp.lt.s32.totalorder %s158, 0
        %s160 = scalar_select %p159, %s158, 0
        %s161 = smul.u32 32, %s160
        %p162 = scmp.lt.s32.totalorder %s15, 1
        %s163 = scalar_select %p162, %s15, 1
        %p164 = scmp.lt.s32.totalorder %s161, 31
        %s165 = scalar_select %p164, %s161, 31
        %s166 = smul.addr %s163, 32
        %s167 = sadd.s32 %s165, %s166
        %s168 = smul.addr %s167, 8
        %s169 = scalar_lea.vmem %s1, %s168
        %s170 = sadd.s32 %s16, %s17
        %p171 = scmp.lt.s32.totalorder %s170, 0
        %s172 = scalar_select %p171, %s170, 0
        %s173 = smul.u32 32, %s172
      $region24: #{tpu_custom_call.1} parent=19 // pred_fallthru
        _
    $region20: #{tpu_custom_call.1} parent=5 // pred_fallthru
      _
    %p174 = scmp.le.s32.totalorder 1, %s8
    %p175 = scmp.lt.s32.totalorder %s8, 3
    %p176 = pnand %p174, %p175
    %p177 = pneg %p176
    // Predicated region
    $region25: #{tpu_custom_call.1} parent=5 // pred_check
      _
    $region26: #{tpu_custom_call.1} parent=5 // pred_check_branch
      %179 = sbr.rel (%p176) target = $region28
    $region27: #{tpu_custom_call.1} parent=5 // pred_region
      %s180 = ssub.s32 %s8, 1
      %s181 = sadd.s32 %s19, %s20
      %p182 = scmp.lt.s32.totalorder %s181, 0
      %s183 = scalar_select %p182, %s181, 0
      %s184 = smul.u32 2, %s183
      %p185 = scmp.lt.s32.totalorder %s184, 1
      %s186 = scalar_select %p185, %s184, 1
      %s187 = smul.addr %s186, 4
      %s188 = scalar_lea.vmem %s0, %s187
      %p189 = pneg %p59
      %p190 = pneg %p56
      %s191 = sadd.s32 %s19, %s20
      %p192 = scmp.lt.s32.totalorder %s191, 0
      %s193 = scalar_select %p192, %s191, 0
      %s194 = smul.u32 32, %s193
      %p195 = scmp.lt.s32.totalorder %s18, 1
      %s196 = scalar_select %p195, %s18, 1
      %p197 = scmp.lt.s32.totalorder %s194, 31
      %s198 = scalar_select %p197, %s194, 31
      %s199 = smul.addr %s196, 32
      %s200 = sadd.s32 %s198, %s199
      %s201 = smul.addr %s200, 8
      %s202 = scalar_lea.vmem %s1, %s201
      %p203 = pneg %p93
      %p204 = pneg %p90
      %p205 = pneg %p121
      %p206 = pneg %p118
      %p207 = scmp.lt.s32.totalorder %s18, 1
      %s208 = scalar_select %p207, %s18, 1
      %p209 = scmp.lt.s32.totalorder %s19, 0
      %s210 = scalar_select %p209, %s19, 0
      %s211 = smul.addr %s210, 7
      %s212 = smul.addr %s208, 7
      %s213 = sadd.s32 %s211, %s212
      %s214 = smul.addr %s213, 8
      %s215 = scalar_lea.vmem %s2, %s214
      %s216 = sadd.s32 %s19, %s20
      %p217 = scmp.lt.s32.totalorder %s216, 0
      %s218 = scalar_select %p217, %s216, 0
      %s219 = smul.u32 2, %s218
      %p220 = scmp.lt.s32.totalorder %s219, 1
      %s221 = scalar_select %p220, %s219, 1
      %s222 = smul.addr %s221, 4
      %s223 = scalar_lea.vmem %s0, %s222
      %s224 = sadd.s32 %s19, %s20
      %p225 = scmp.lt.s32.totalorder %s224, 0
      %s226 = scalar_select %p225, %s224, 0
      %s227 = smul.u32 2, %s226
      %s228 = sadd.s32 %s19, %s20
      %p229 = scmp.lt.s32.totalorder %s228, 0
      %s230 = scalar_select %p229, %s228, 0
      %s231 = smul.u32 32, %s230
      %p232 = scmp.lt.s32.totalorder %s18, 1
      %s233 = scalar_select %p232, %s18, 1
      %p234 = scmp.lt.s32.totalorder %s231, 31
      %s235 = scalar_select %p234, %s231, 31
      %s236 = smul.addr %s233, 32
      %s237 = sadd.s32 %s235, %s236
      %s238 = smul.addr %s237, 8
      %s239 = scalar_lea.vmem %s1, %s238
      %s240 = sadd.s32 %s19, %s20
      %p241 = scmp.lt.s32.totalorder %s240, 0
      %s242 = scalar_select %p241, %s240, 0
      %s243 = smul.u32 32, %s242
      %p244 = scmp.lt.s32.totalorder %s18, 1
      %s245 = scalar_select %p244, %s18, 1
      %p246 = scmp.lt.s32.totalorder %s19, 0
      %s247 = scalar_select %p246, %s19, 0
      %s248 = smul.addr %s247, 7
      %s249 = smul.addr %s245, 7
      %s250 = sadd.s32 %s248, %s249
      %s251 = smul.addr %s250, 8
      %s252 = scalar_lea.vmem %s2, %s251
      %p253 = scmp.eq.s32.totalorder %s20, 0
      // Predicated region
      $region29: #{tpu_custom_call.1} parent=27 // pred_check
        %p254 = pneg %p253
      $region30: #{tpu_custom_call.1} parent=27 // pred_check_branch
        %256 = sbr.rel (%p254) target = $region32
      $region31: #{tpu_custom_call.1} parent=27 // pred_region
        %vm257 = vcmask 523264
        %258 = vst.msk [vmem:[#allocation2] sm:$0xff] %vm257, 0.0
        %259 = vst.msk [vmem:[#allocation2 + $0x8] sm:$0xff] %vm257, 0.0
        %260 = vst.msk [vmem:[#allocation2 + $0x10] sm:$0xff] %vm257, 0.0
        %261 = vst.msk [vmem:[#allocation2 + $0x18] sm:$0xff] %vm257, 0.0
        %262 = vst.msk [vmem:[#allocation2 + $0x20] sm:$0xff] %vm257, 0.0
        %263 = vst.msk [vmem:[#allocation2 + $0x28] sm:$0xff] %vm257, 0.0
        %vm264 = vcmask 517120
        %265 = vst.msk [vmem:[#allocation2 + $0x30] sm:$0x3] %vm264, 0.0
      $region32: #{tpu_custom_call.1} parent=27 // pred_fallthru
        _
      %v266 = vld [vmem:[%s239] sm:$0xff]
      %v267 = vld [vmem:[%s239 + $0x8] sm:$0xff]
      %v268 = vld [vmem:[%s239 + $0x10] sm:$0xff]
      %v269 = vld [vmem:[%s239 + $0x18] sm:$0xff]
      %v270 = vld [vmem:[%s239 + $0x20] sm:$0xff]
      %v271 = vld [vmem:[%s239 + $0x28] sm:$0xff]
      %v272 = vld [vmem:[%s239 + $0x30] sm:$0xff]
      %v273 = vld [vmem:[%s239 + $0x38] sm:$0xff]
      %v274 = vld [vmem:[%s239 + $0x40] sm:$0xff]
      %v275 = vld [vmem:[%s239 + $0x48] sm:$0xff]
      %v276 = vld [vmem:[%s239 + $0x50] sm:$0xff]
      %v277 = vld [vmem:[%s239 + $0x58] sm:$0xff]
      %v278 = vld [vmem:[%s239 + $0x60] sm:$0xff]
      %v279 = vld [vmem:[%s239 + $0x68] sm:$0xff]
      %v280 = vld [vmem:[%s239 + $0x70] sm:$0xff]
      %v281 = vld [vmem:[%s239 + $0x78] sm:$0xff]
      %v282 = vld [vmem:[%s239 + $0x80] sm:$0xff]
      %v283 = vld [vmem:[%s239 + $0x88] sm:$0xff]
      %v284 = vld [vmem:[%s239 + $0x90] sm:$0xff]
      %v285 = vld [vmem:[%s239 + $0x98] sm:$0xff]
      %v286 = vld [vmem:[%s239 + $0xa0] sm:$0xff]
      %v287 = vld [vmem:[%s239 + $0xa8] sm:$0xff]
      %v288 = vld [vmem:[%s239 + $0xb0] sm:$0xff]
      %v289 = vld [vmem:[%s239 + $0xb8] sm:$0xff]
      %v290 = vld [vmem:[%s239 + $0xc0] sm:$0xff]
      %v291 = vld [vmem:[%s239 + $0xc8] sm:$0xff]
      %v292 = vld [vmem:[%s239 + $0xd0] sm:$0xff]
      %v293 = vld [vmem:[%s239 + $0xd8] sm:$0xff]
      %v294 = vld [vmem:[%s239 + $0xe0] sm:$0xff]
      %v295 = vld [vmem:[%s239 + $0xe8] sm:$0xff]
      %v296 = vld [vmem:[%s239 + $0xf0] sm:$0xff]
      %v297 = vld [vmem:[%s239 + $0xf8] sm:$0xff]
      %v298 = vld [vmem:[#allocation2] sm:$0xff]
      %v299 = vld [vmem:[#allocation2 + $0x8] sm:$0xff]
      %v300 = vld [vmem:[#allocation2 + $0x10] sm:$0xff]
      %v301 = vld [vmem:[#allocation2 + $0x18] sm:$0xff]
      %v302 = vld [vmem:[#allocation2 + $0x20] sm:$0xff]
      %v303 = vld [vmem:[#allocation2 + $0x28] sm:$0xff]
      %v304 = vld [vmem:[#allocation2 + $0x30] sm:$0x3]
      %v305 = vld [vmem:[%s223] sm:$0xff]
      %v306 = vld [vmem:[%s223 + $0x8] sm:$0xff]
      %v307 = vld [vmem:[%s223 + $0x10] sm:$0xff]
      %v308 = vld [vmem:[%s223 + $0x18] sm:$0xff]
      %v309 = vld [vmem:[%s223 + $0x20] sm:$0xff]
      %v310 = vld [vmem:[%s223 + $0x28] sm:$0xff]
      %v311 = vld [vmem:[%s223 + $0x30] sm:$0x11]
      %v312 = vunpack.c.l.bf16 %v305
      %v313 = vunpack.c.h.bf16 %v305
      %v314 = vunpack.c.l.bf16 %v306
      %v315 = vunpack.c.h.bf16 %v306
      %v316 = vunpack.c.l.bf16 %v307
      %v317 = vunpack.c.h.bf16 %v307
      %v318 = vunpack.c.l.bf16 %v308
      %v319 = vunpack.c.h.bf16 %v308
      %v320 = vunpack.c.l.bf16 %v309
      %v321 = vunpack.c.h.bf16 %v309
      %v322 = vunpack.c.l.bf16 %v310
      %v323 = vunpack.c.h.bf16 %v310
      %v324 = vunpack.c.l.bf16 %v311
      %v325 = vunpack.c.h.bf16 %v311
      %326 = vmatprep.subr.mxu0 0.0
      %327 = vmatpush1.msra.mxu0 %v266
      %328 = vmatprep.subr.mxu0 0.0
      %329 = vmatpush1.msra.mxu0 %v267
      %330 = vmatprep.subr.mxu0 0.0
      %331 = vmatpush1.msra.mxu0 %v268
      %332 = vmatprep.subr.mxu0 0.0
      %333 = vmatpush1.msra.mxu0 %v269
      %334 = vmatprep.subr.mxu0 0.0
      %335 = vmatpush1.msra.mxu0 %v270
      %336 = vmatprep.subr.mxu0 0.0
      %337 = vmatpush1.msra.mxu0 %v271
      %338 = vmatprep.subr.mxu0 0.0
      %339 = vmatpush1.msra.mxu0 %v272
      %340 = vmatprep.subr.mxu0 0.0
      %341 = vmatpush1.msra.mxu0 %v273
      %342 = vmatprep.subr.mxu0 0.0
      %343 = vmatpush1.msra.mxu0 %v274
      %344 = vmatprep.subr.mxu0 0.0
      %345 = vmatpush1.msra.mxu0 %v275
      %346 = vmatprep.subr.mxu0 0.0
      %347 = vmatpush1.msra.mxu0 %v276
      %348 = vmatprep.subr.mxu0 0.0
      %349 = vmatpush1.msra.mxu0 %v277
      %350 = vmatprep.subr.mxu0 0.0
      %351 = vmatpush1.msra.mxu0 %v278
      %352 = vmatprep.subr.mxu0 0.0
      %353 = vmatpush1.msra.mxu0 %v279
      %354 = vmatprep.subr.mxu0 0.0
      %355 = vmatpush1.msra.mxu0 %v280
      %356 = vmatprep.subr.mxu0 0.0
      %357 = vmatpush1.msra.mxu0 %v281
      %358 = vmatprep.subr.mxu0 0.0
      %359 = vmatpush1.msra.mxu0 %v282
      %360 = vmatprep.subr.mxu0 0.0
      %361 = vmatpush1.msra.mxu0 %v283
      %362 = vmatprep.subr.mxu0 0.0
      %363 = vmatpush1.msra.mxu0 %v284
      %364 = vmatprep.subr.mxu0 0.0
      %365 = vmatpush1.msra.mxu0 %v285
      %366 = vmatprep.subr.mxu0 0.0
      %367 = vmatpush1.msra.mxu0 %v286
      %368 = vmatprep.subr.mxu0 0.0
      %369 = vmatpush1.msra.mxu0 %v287
      %370 = vmatprep.subr.mxu0 0.0
      %371 = vmatpush1.msra.mxu0 %v288
      %372 = vmatprep.subr.mxu0 0.0
      %373 = vmatpush1.msra.mxu0 %v289
      %374 = vmatprep.subr.mxu0 0.0
      %375 = vmatpush1.msra.mxu0 %v290
      %376 = vmatprep.subr.mxu0 0.0
      %377 = vmatpush1.msra.mxu0 %v291
      %378 = vmatprep.subr.mxu0 0.0
      %379 = vmatpush1.msra.mxu0 %v292
      %380 = vmatprep.subr.mxu0 0.0
      %381 = vmatpush1.msra.mxu0 %v293
      %382 = vmatprep.subr.mxu0 0.0
      %383 = vmatpush1.msra.mxu0 %v294
      %384 = vmatprep.subr.mxu0 0.0
      %385 = vmatpush1.msra.mxu0 %v295
      %386 = vmatprep.subr.mxu0 0.0
      %387 = vmatpush1.msra.mxu0 %v296
      %388 = vmatprep.subr.mxu0 0.0
      %389 = vmatpush1.msra.mxu0 %v297
      %390 = vmatprep.mubr.f32.mxu0 %v313
      %391 = vmatmul.mubr.f32.gmra.mrb[0].mxu0 %v312
      %v392 = vpop.f32.mrb[0].mxu0
      %v393 = vadd.f32 0.0, %v392
      %v394 = vpop.f32.mrb[0].mxu0
      %395 = vmatprep.mubr.f32.mxu0 %v315
      %396 = vmatmul.mubr.f32.gmra.mrb[0].mxu0 %v314
      %v397 = vpop.f32.mrb[0].mxu0
      %v398 = vadd.f32 0.0, %v397
      %v399 = vpop.f32.mrb[0].mxu0
      %400 = vmatprep.mubr.f32.mxu0 %v317
      %401 = vmatmul.mubr.f32.gmra.mrb[0].mxu0 %v316
      %v402 = vpop.f32.mrb[0].mxu0
      %v403 = vadd.f32 0.0, %v402
      %v404 = vpop.f32.mrb[0].mxu0
      %405 = vmatprep.mubr.f32.mxu0 %v319
      %406 = vmatmul.mubr.f32.gmra.mrb[0].mxu0 %v318
      %v407 = vpop.f32.mrb[0].mxu0
      %v408 = vadd.f32 0.0, %v407
      %v409 = vpop.f32.mrb[0].mxu0
      %410 = vmatprep.mubr.f32.mxu0 %v321
      %411 = vmatmul.mubr.f32.gmra.mrb[0].mxu0 %v320
      %v412 = vpop.f32.mrb[0].mxu0
      %v413 = vadd.f32 0.0, %v412
      %v414 = vpop.f32.mrb[0].mxu0
      %415 = vmatprep.mubr.f32.mxu0 %v323
      %416 = vmatmul.mubr.f32.gmra.mrb[0].mxu0 %v322
      %v417 = vpop.f32.mrb[0].mxu0
      %v418 = vadd.f32 0.0, %v417
      %v419 = vpop.f32.mrb[0].mxu0
      %420 = vmatprep.mubr.f32.mxu0 %v325
      %421 = vmatmul.mubr.f32.gmra.mrb[0].mxu0 %v324
      %v422 = vpop.f32.mrb[0].mxu0
      %v423 = vadd.f32 0.0, %v422
      %v424 = vpop.f32.mrb[0].mxu0
      %425 = vdwg.mxu0
      %v426 = vadd.f32 %v298, %v393
      %v427 = vadd.f32 %v299, %v398
      %v428 = vadd.f32 %v300, %v403
      %v429 = vadd.f32 %v301, %v408
      %v430 = vadd.f32 %v302, %v413
      %v431 = vadd.f32 %v303, %v418
      %v432 = vadd.f32 %v304, %v423
      %vm433 = vcmask 523264
      %434 = vst.msk [vmem:[#allocation2] sm:$0xff] %vm433, %v426
      %435 = vst.msk [vmem:[#allocation2 + $0x8] sm:$0xff] %vm433, %v427
      %436 = vst.msk [vmem:[#allocation2 + $0x10] sm:$0xff] %vm433, %v428
      %437 = vst.msk [vmem:[#allocation2 + $0x18] sm:$0xff] %vm433, %v429
      %438 = vst.msk [vmem:[#allocation2 + $0x20] sm:$0xff] %vm433, %v430
      %439 = vst.msk [vmem:[#allocation2 + $0x28] sm:$0xff] %vm433, %v431
      %vm440 = vcmask 517120
      %441 = vst.msk [vmem:[#allocation2 + $0x30] sm:$0x3] %vm440, %v432
      // Predicated region
      $region33: #{tpu_custom_call.1} parent=27 // pred_check
        %p442 = pneg %p253
      $region34: #{tpu_custom_call.1} parent=27 // pred_check_branch
        %444 = sbr.rel (%p442) target = $region36
      $region35: #{tpu_custom_call.1} parent=27 // pred_region
        %v445 = vld [vmem:[#allocation2] sm:$0xff]
        %v446 = vld [vmem:[#allocation2 + $0x8] sm:$0xff]
        %v447 = vld [vmem:[#allocation2 + $0x10] sm:$0xff]
        %v448 = vld [vmem:[#allocation2 + $0x18] sm:$0xff]
        %v449 = vld [vmem:[#allocation2 + $0x20] sm:$0xff]
        %v450 = vld [vmem:[#allocation2 + $0x28] sm:$0xff]
        %v451 = vld [vmem:[#allocation2 + $0x30] sm:$0x3]
        %452 = vst.msk [vmem:[%s252] sm:$0xff] %vm433, %v445
        %453 = vst.msk [vmem:[%s252 + $0x8] sm:$0xff] %vm433, %v446
        %454 = vst.msk [vmem:[%s252 + $0x10] sm:$0xff] %vm433, %v447
        %455 = vst.msk [vmem:[%s252 + $0x18] sm:$0xff] %vm433, %v448
        %456 = vst.msk [vmem:[%s252 + $0x20] sm:$0xff] %vm433, %v449
        %457 = vst.msk [vmem:[%s252 + $0x28] sm:$0xff] %vm433, %v450
        %458 = vst.msk [vmem:[%s252 + $0x30] sm:$0x3] %vm440, %v451
      $region36: #{tpu_custom_call.1} parent=27 // pred_fallthru
        _
      %p459 = scmp.lt.s32.totalorder %s18, 1
      %s460 = scalar_select %p459, %s18, 1
      %p461 = scmp.lt.s32.totalorder %s19, 0
      %s462 = scalar_select %p461, %s19, 0
      %s463 = smul.addr %s462, 7
      %s464 = smul.addr %s460, 7
      %s465 = sadd.s32 %s463, %s464
      %s466 = smul.addr %s465, 8
      %s467 = scalar_lea.vmem %s2, %s466
      // Predicated region
      $region37: #{tpu_custom_call.1} parent=27 // pred_check
        %p468 = pneg %p118
      $region38: #{tpu_custom_call.1} parent=27 // pred_check_branch
        %470 = sbr.rel (%p468) target = $region40
      $region39: #{tpu_custom_call.1} parent=27 // pred_region
        _
      $region40: #{tpu_custom_call.1} parent=27 // pred_fallthru
        _
    $region28: #{tpu_custom_call.1} parent=5 // pred_fallthru
      _
    %p471 = scmp.le.s32.totalorder 2, %s8
    // Predicated region
    $region41: #{tpu_custom_call.1} parent=5 // pred_check
      %p472 = pneg %p471
    $region42: #{tpu_custom_call.1} parent=5 // pred_check_branch
      %474 = sbr.rel (%p472) target = $region44
    $region43: #{tpu_custom_call.1} parent=5 // pred_region
      %s475 = ssub.s32 %s8, 2
      // Predicated region
      $region45: #{tpu_custom_call.1} parent=43 // pred_check
        %p476 = pneg %p124
      $region46: #{tpu_custom_call.1} parent=43 // pred_check_branch
        %478 = sbr.rel (%p476) target = $region48
      $region47: #{tpu_custom_call.1} parent=43 // pred_region
        %p479 = scmp.lt.s32.totalorder %s21, 1
        %s480 = scalar_select %p479, %s21, 1
        %p481 = scmp.lt.s32.totalorder %s22, 0
        %s482 = scalar_select %p481, %s22, 0
        %s483 = smul.addr %s482, 7
        %s484 = smul.addr %s480, 7
        %s485 = sadd.s32 %s483, %s484
        %s486 = smul.addr %s485, 8
        %s487 = scalar_lea.vmem %s2, %s486
      $region48: #{tpu_custom_call.1} parent=43 // pred_fallthru
        _
    $region44: #{tpu_custom_call.1} parent=5 // pred_fallthru
      _
  $region6: #{tpu_custom_call.1} parent=0 // loop_footer
    %s12 = sadd.s32 1, %s8
  $region7: #{tpu_custom_call.1} parent=0 // loop_footer_branch
    %7 = sbr.rel target = $region3
  $region8: #{tpu_custom_call.1} parent=0 // loop_exit
    _

</llo_original>
